<compile_context>
chip_gen: v7x
topology: tpu7x:2x2x1
jax: 0.10.0
libtpu: 0.0.40
codegen_flags: <defaults>
</compile_context>

<pallas_src>
import functools

import jax
import jax.numpy as jnp
from jax.experimental import pallas as pl
from jax.experimental.pallas import tpu as pltpu


def _critic_kernel(xT_ref, w1_ref, b1_ref, w2_ref, b2_ref, w3_ref, b3_ref,
                   qT_ref):
    # Layer 1: single MXU dot over the fused (state+action) contraction.
    h1 = jnp.dot(w1_ref[...], xT_ref[...],
                 preferred_element_type=jnp.float32)          # (40, TB)
    h1 = jnp.maximum(h1 + b1_ref[...], 0.0)

    # Layer 2: (20, 40) @ (40, TB); sigmoid via a single EUP tanh (exact).
    h2 = jnp.dot(w2_ref[...], h1,
                 preferred_element_type=jnp.float32) + b2_ref[...]
    h2 = 0.5 * jnp.tanh(0.5 * h2) + 0.5                        # == sigmoid

    # Layer 3 (out_features = 1): VPU broadcast-multiply + sublane reduce —
    # skips an MXU matmul whose M=1 result would be drain-bound.
    q = jnp.sum(w3_ref[...] * h2, axis=0, keepdims=True) + b3_ref[...]
    qT_ref[...] = q.astype(qT_ref.dtype)                       # (1, TB)


@functools.lru_cache(maxsize=None)
def _default_tile_b():
    """Generation-aware default batch tile (lanes), multiple of 128."""
    try:
        kind = jax.devices()[0].device_kind.lower()
    except Exception:  # pragma: no cover - be permissive off-TPU
        kind = ""
    if "v7" in kind:
        return 32768
    if "v6" in kind:
        return 16384
    return 8192          # v5e and anything unrecognized


def _round_up(x, m):
    return ((x + m - 1) // m) * m


@functools.partial(jax.jit, static_argnames=("tile_b",))
def critic_forward(s, a, params, *, tile_b=None):
    """s: (B, state_dim), a: (B, action_dim) -> Q: (B, 1)."""
    w1, b1, w2, b2, w3, b3 = params
    B, ds = s.shape
    da = a.shape[1]
    d_in = ds + da

    if tile_b is None:
        tile_b = _default_tile_b()
    tile_b = max(128, _round_up(int(tile_b), 128))
    # Keep >= 2 grid steps when B allows so the "parallel" batch axis can be
    # split across v7x's two TensorCores (harmless on single-TC v5e/v6e).
    TB = max(128, min(tile_b, _round_up(pl.cdiv(B, 2), 128)))

    # Layout plumbing only (fuses into one XLA copy under jit): concat the
    # state/action features and put batch on the lane axis.
    xT = jnp.concatenate([s, a], axis=1).T                     # (d_in, B)

    resident = lambda arr: pl.BlockSpec(arr.shape, lambda i: (0, 0))

    qT = pl.pallas_call(
        _critic_kernel,
        grid=(pl.cdiv(B, TB),),
        in_specs=[pl.BlockSpec((d_in, TB), lambda i: (0, i)),
                  resident(w1), resident(b1),
                  resident(w2), resident(b2),
                  resident(w3), resident(b3)],
        out_specs=pl.BlockSpec((1, TB), lambda i: (0, i)),
        out_shape=jax.ShapeDtypeStruct((1, B), jnp.float32),
        compiler_params=pltpu.CompilerParams(
            dimension_semantics=("parallel",)),
    )(xT, w1, b1, w2, b2, w3, b3)

    return qT[0, :, None]   # (B, 1), matching the PyTorch module


def init_params(key, state_dim, action_dim):
    k = jax.random.split(key, 6)
    d_in = state_dim + action_dim
    # Weights ~ N(0, 0.1) as in the PyTorch __init__, stored (out, in); W3 is
    # kept transposed (20, 1) for the in-kernel VPU reduction.
    w1 = 0.1 * jax.random.normal(k[0], (40, d_in), jnp.float32)
    w2 = 0.1 * jax.random.normal(k[1], (20, 40), jnp.float32)
    w3 = 0.1 * jax.random.normal(k[2], (20, 1), jnp.float32)
    # Biases: PyTorch default U(-1/sqrt(fan_in), 1/sqrt(fan_in)); kept 2-D
    # (features, 1) so they broadcast along the lane (batch) axis in-kernel.
    b1 = jax.random.uniform(k[3], (40, 1), jnp.float32, -1.0, 1.0) / jnp.sqrt(float(d_in))
    b2 = jax.random.uniform(k[4], (20, 1), jnp.float32, -1.0, 1.0) / jnp.sqrt(40.0)
    b3 = jax.random.uniform(k[5], (1, 1), jnp.float32, -1.0, 1.0) / jnp.sqrt(20.0)
    return (w1, b1, w2, b2, w3, b3)


def critic_reference(s, a, params):
    w1, b1, w2, b2, w3, b3 = params
    x = jnp.concatenate([s, a], axis=1)
    h1 = jnp.maximum(x @ w1.T + b1[:, 0], 0.0)
    h2 = jax.nn.sigmoid(h1 @ w2.T + b2[:, 0])
    return h2 @ w3 + b3[0]


if __name__ == "__main__":
    key = jax.random.PRNGKey(0)
    ks, ka, kp, ks2, ka2 = jax.random.split(key, 5)

    batch, state_dim, action_dim = 2, 6, 2            # small shapes from forward(s, a)
    s = jax.random.normal(ks, (batch, state_dim), jnp.float32)
    a = jax.random.normal(ka, (batch, action_dim), jnp.float32)
    params = init_params(kp, state_dim, action_dim)

    q = jax.block_until_ready(critic_forward(s, a, params))
    q_ref = critic_reference(s, a, params)
    assert q.shape == (batch, 1)
    assert jnp.allclose(q, q_ref, atol=1e-5, rtol=1e-5)

    # Multi-tile path: uneven batch exercises the ragged last block and a
    # 3-step batch grid (TB=128).
    B2 = 300
    s2 = jax.random.normal(ks2, (B2, state_dim), jnp.float32)
    a2 = jax.random.normal(ka2, (B2, action_dim), jnp.float32)
    q2 = jax.block_until_ready(critic_forward(s2, a2, params, tile_b=128))
    assert q2.shape == (B2, 1)
    assert jnp.allclose(q2, critic_reference(s2, a2, params), atol=1e-5, rtol=1e-5)

    print("KERNEL_OK")
</pallas_src>

<mosaic_0001>
module attributes {stable_mosaic.version = 11 : i64} {
  func.func @_critic_kernel(%arg0: i32, %arg1: memref<8x128xf32, #tpu.memory_space<vmem>>, %arg2: memref<40x8xf32, #tpu.memory_space<vmem>>, %arg3: memref<40x1xf32, #tpu.memory_space<vmem>>, %arg4: memref<20x40xf32, #tpu.memory_space<vmem>>, %arg5: memref<20x1xf32, #tpu.memory_space<vmem>>, %arg6: memref<20x1xf32, #tpu.memory_space<vmem>>, %arg7: memref<1x1xf32, #tpu.memory_space<vmem>>, %arg8: memref<1x128xf32, #tpu.memory_space<vmem>>) attributes {dimension_semantics = [#tpu.dimension_semantics<parallel>], iteration_bounds = array<i64: 1>, scalar_prefetch = 0 : i64, scratch_operands = 0 : i64, tpu.core_type = #tpu.core_type<tc>, window_params = [{transform_indices = @transform_0, window_bounds = array<i64: 8, 128>}, {pipeline_mode = #tpu.pipeline_mode<synchronous>, transform_indices = @transform_1, window_bounds = array<i64: 40, 8>}, {pipeline_mode = #tpu.pipeline_mode<synchronous>, transform_indices = @transform_2, window_bounds = array<i64: 40, 1>}, {pipeline_mode = #tpu.pipeline_mode<synchronous>, transform_indices = @transform_3, window_bounds = array<i64: 20, 40>}, {pipeline_mode = #tpu.pipeline_mode<synchronous>, transform_indices = @transform_4, window_bounds = array<i64: 20, 1>}, {pipeline_mode = #tpu.pipeline_mode<synchronous>, transform_indices = @transform_5, window_bounds = array<i64: 20, 1>}, {pipeline_mode = #tpu.pipeline_mode<synchronous>, transform_indices = @transform_6, window_bounds = array<i64: 1, 1>}, {transform_indices = @transform_7, window_bounds = array<i64: 1, 128>}]} {
    %c0 = arith.constant 0 : index
    %c0_0 = arith.constant 0 : index
    %0 = vector.load %arg2[%c0, %c0_0] : memref<40x8xf32, #tpu.memory_space<vmem>>, vector<40x8xf32>
    %c0_1 = arith.constant 0 : index
    %c0_2 = arith.constant 0 : index
    %1 = vector.load %arg1[%c0_1, %c0_2] : memref<8x128xf32, #tpu.memory_space<vmem>>, vector<8x128xf32>
    %cst = arith.constant dense<0.000000e+00> : vector<40x128xf32>
    %2 = tpu.matmul %0, %1, %cst {dimension_numbers = #tpu.dot_dimension_numbers<[1], [0], [0], [1], [0, 0, 1, 1], [], []>} : vector<40x8xf32>, vector<8x128xf32>, vector<40x128xf32> -> vector<40x128xf32>
    %c0_3 = arith.constant 0 : index
    %c0_4 = arith.constant 0 : index
    %3 = vector.load %arg3[%c0_3, %c0_4] : memref<40x1xf32, #tpu.memory_space<vmem>>, vector<40x1xf32>
    %4 = vector.broadcast %3 : vector<40x1xf32> to vector<40x128xf32>
    %5 = arith.addf %2, %4 : vector<40x128xf32>
    %cst_5 = arith.constant 0.000000e+00 : f32
    %6 = vector.broadcast %cst_5 : f32 to vector<40x128xf32>
    %7 = arith.maximumf %5, %6 : vector<40x128xf32>
    %c0_6 = arith.constant 0 : index
    %c0_7 = arith.constant 0 : index
    %8 = vector.load %arg4[%c0_6, %c0_7] : memref<20x40xf32, #tpu.memory_space<vmem>>, vector<20x40xf32>
    %cst_8 = arith.constant dense<0.000000e+00> : vector<20x128xf32>
    %9 = tpu.matmul %8, %7, %cst_8 {dimension_numbers = #tpu.dot_dimension_numbers<[1], [0], [0], [1], [0, 0, 1, 1], [], []>} : vector<20x40xf32>, vector<40x128xf32>, vector<20x128xf32> -> vector<20x128xf32>
    %c0_9 = arith.constant 0 : index
    %c0_10 = arith.constant 0 : index
    %10 = vector.load %arg5[%c0_9, %c0_10] : memref<20x1xf32, #tpu.memory_space<vmem>>, vector<20x1xf32>
    %11 = vector.broadcast %10 : vector<20x1xf32> to vector<20x128xf32>
    %12 = arith.addf %9, %11 : vector<20x128xf32>
    %cst_11 = arith.constant 5.000000e-01 : f32
    %13 = vector.broadcast %cst_11 : f32 to vector<20x128xf32>
    %14 = arith.mulf %13, %12 : vector<20x128xf32>
    %15 = math.tanh %14 : vector<20x128xf32>
    %cst_12 = arith.constant 5.000000e-01 : f32
    %16 = vector.broadcast %cst_12 : f32 to vector<20x128xf32>
    %17 = arith.mulf %16, %15 : vector<20x128xf32>
    %cst_13 = arith.constant 5.000000e-01 : f32
    %18 = vector.broadcast %cst_13 : f32 to vector<20x128xf32>
    %19 = arith.addf %17, %18 : vector<20x128xf32>
    %c0_14 = arith.constant 0 : index
    %c0_15 = arith.constant 0 : index
    %20 = vector.load %arg6[%c0_14, %c0_15] : memref<20x1xf32, #tpu.memory_space<vmem>>, vector<20x1xf32>
    %21 = vector.broadcast %20 : vector<20x1xf32> to vector<20x128xf32>
    %22 = arith.mulf %21, %19 : vector<20x128xf32>
    %cst_16 = arith.constant dense<0.000000e+00> : vector<128xf32>
    %23 = vector.multi_reduction <add>, %22, %cst_16 [0] : vector<20x128xf32> to vector<128xf32>
    %24 = vector.shape_cast %23 : vector<128xf32> to vector<1x128xf32>
    %c0_17 = arith.constant 0 : index
    %c0_18 = arith.constant 0 : index
    %25 = vector.load %arg7[%c0_17, %c0_18] : memref<1x1xf32, #tpu.memory_space<vmem>>, vector<1x1xf32>
    %26 = vector.broadcast %25 : vector<1x1xf32> to vector<1x128xf32>
    %27 = arith.addf %24, %26 : vector<1x128xf32>
    %c0_19 = arith.constant 0 : index
    %c0_20 = arith.constant 0 : index
    %28 = vector.load %arg8[%c0_19, %c0_20] : memref<1x128xf32, #tpu.memory_space<vmem>>, vector<1x128xf32>
    tpu.vector_store %arg8[%c0_19, %c0_20], %27 {strides = array<i32>} : memref<1x128xf32, #tpu.memory_space<vmem>>, vector<1x128xf32>,
    return
  }
  func.func @transform_0(%arg0: i32) -> (i32, i32) {
    %c0_i32 = arith.constant 0 : i32
    %c0_i32_0 = arith.constant 0 : i32
    return %c0_i32, %arg0 : i32, i32
  }
  func.func @transform_1(%arg0: i32) -> (i32, i32) {
    %c0_i32 = arith.constant 0 : i32
    %c0_i32_0 = arith.constant 0 : i32
    %c0_i32_1 = arith.constant 0 : i32
    return %c0_i32, %c0_i32_0 : i32, i32
  }
  func.func @transform_2(%arg0: i32) -> (i32, i32) {
    %c0_i32 = arith.constant 0 : i32
    %c0_i32_0 = arith.constant 0 : i32
    %c0_i32_1 = arith.constant 0 : i32
    return %c0_i32, %c0_i32_0 : i32, i32
  }
  func.func @transform_3(%arg0: i32) -> (i32, i32) {
    %c0_i32 = arith.constant 0 : i32
    %c0_i32_0 = arith.constant 0 : i32
    %c0_i32_1 = arith.constant 0 : i32
    return %c0_i32, %c0_i32_0 : i32, i32
  }
  func.func @transform_4(%arg0: i32) -> (i32, i32) {
    %c0_i32 = arith.constant 0 : i32
    %c0_i32_0 = arith.constant 0 : i32
    %c0_i32_1 = arith.constant 0 : i32
    return %c0_i32, %c0_i32_0 : i32, i32
  }
  func.func @transform_5(%arg0: i32) -> (i32, i32) {
    %c0_i32 = arith.constant 0 : i32
    %c0_i32_0 = arith.constant 0 : i32
    %c0_i32_1 = arith.constant 0 : i32
    return %c0_i32, %c0_i32_0 : i32, i32
  }
  func.func @transform_6(%arg0: i32) -> (i32, i32) {
    %c0_i32 = arith.constant 0 : i32
    %c0_i32_0 = arith.constant 0 : i32
    %c0_i32_1 = arith.constant 0 : i32
    return %c0_i32, %c0_i32_0 : i32, i32
  }
  func.func @transform_7(%arg0: i32) -> (i32, i32) {
    %c0_i32 = arith.constant 0 : i32
    %c0_i32_0 = arith.constant 0 : i32
    return %c0_i32, %arg0 : i32, i32
  }
}

</mosaic_0001>

<llo_original>
// kernel: critic_forward.1
$region0: #{critic_forward.1}
  #allocation0 [shape = 'u32[]', space=smem, size = 0x4, offset = 0x4, fixed_abs, tag = 'smem constant byte address 0x4 - core index']
  #allocation1 [shape = 'u32[144,128]{1,0:T(1,128)}', space=vmem, size = 0x12000, scoped, tag = 'internal scratch']
  #allocation2 [shape = 'f32[1,1]{1,0:T(1,128)S(1)}', space=vmem, size = 0x200, scoped, tag = 'scoped memory for critic_forward.1']
  %s0 = inlined_call_operand.vmem [shape: f32[8,2], index: 0, kind: input, shape index: {}]
  %s1 = inlined_call_operand.vmem [shape: f32[40,8], index: 1, kind: input, shape index: {}]
  %s2 = inlined_call_operand.vmem [shape: f32[40,1], index: 2, kind: input, shape index: {}]
  %s3 = inlined_call_operand.vmem [shape: f32[20,40], index: 3, kind: input, shape index: {}]
  %s4 = inlined_call_operand.vmem [shape: f32[20,1], index: 4, kind: input, shape index: {}]
  %s5 = inlined_call_operand.vmem [shape: f32[20,1], index: 5, kind: input, shape index: {}]
  %s6 = inlined_call_operand.<no memory space> [shape: f32[1,1], index: 6, kind: input, shape index: {}]
  %s7 = inlined_call_operand.hbm [shape: f32[1,2], index: 7, kind: output, shape index: {}]
  %s8 = sld [smem:[#allocation0]]
  $region38: #{critic_forward.1} parent=0
    _
  %s10 = ssub.s32 1, %s8
  %s11 = scalar_select 0, %s10, %s8
  %v12 = vstv %s6
  %13 = vst [vmem:[#allocation2] sm:$0x1] %v12
  $region1: #{critic_forward.1} parent=0
    #allocation3 [shape = 'u8[512]{0}', space=vmem, size = 0x400, scoped, tag = 'output window, operand 0, single buffered']
    #allocation4 [shape = 's32[1]{0}', space=sflag, size = 0x4, scoped, tag = 'scoped memory for critic_forward.1']
    %14 = vsyncpa [#allocation4], 0
    // Predicated region
    $region2: #{critic_forward.1} parent=1 // pred_check
      _
    $region3: #{critic_forward.1} parent=1 // pred_check_branch
      %16 = sbr.rel (0) target = $region5
    $region4: #{critic_forward.1} parent=1 // pred_region
      _
    $region5: #{critic_forward.1} parent=1 // pred_fallthru
      _
    // Predicated region
    $region6: #{critic_forward.1} parent=1 // pred_check
      _
    $region7: #{critic_forward.1} parent=1 // pred_check_branch
      %18 = sbr.rel (0) target = $region9
    $region8: #{critic_forward.1} parent=1 // pred_region
      _
    $region9: #{critic_forward.1} parent=1 // pred_fallthru
      _
    // Predicated region
    $region10: #{critic_forward.1} parent=1 // pred_check
      _
    $region11: #{critic_forward.1} parent=1 // pred_check_branch
      %20 = sbr.rel (0) target = $region13
    $region12: #{critic_forward.1} parent=1 // pred_region
      _
    $region13: #{critic_forward.1} parent=1 // pred_fallthru
      _
    // Predicated region
    $region14: #{critic_forward.1} parent=1 // pred_check
      _
    $region15: #{critic_forward.1} parent=1 // pred_check_branch
      %22 = sbr.rel (0) target = $region17
    $region16: #{critic_forward.1} parent=1 // pred_region
      _
    $region17: #{critic_forward.1} parent=1 // pred_fallthru
      _
    // Predicated region
    $region18: #{critic_forward.1} parent=1 // pred_check
      _
    $region19: #{critic_forward.1} parent=1 // pred_check_branch
      %24 = sbr.rel (0) target = $region21
    $region20: #{critic_forward.1} parent=1 // pred_region
      _
    $region21: #{critic_forward.1} parent=1 // pred_fallthru
      _
    // Predicated region
    $region22: #{critic_forward.1} parent=1 // pred_check
      _
    $region23: #{critic_forward.1} parent=1 // pred_check_branch
      %26 = sbr.rel (0) target = $region25
    $region24: #{critic_forward.1} parent=1 // pred_region
      _
    $region25: #{critic_forward.1} parent=1 // pred_fallthru
      _
    // Predicated region
    $region26: #{critic_forward.1} parent=1 // pred_check
      _
    $region27: #{critic_forward.1} parent=1 // pred_check_branch
      %28 = sbr.rel (0) target = $region29
    $region28: #{critic_forward.1} parent=1 // pred_region
      _
    $region29: #{critic_forward.1} parent=1 // pred_fallthru
      _
    %v29 = vld [vmem:[%s1] sm:$0xff]
    %v30 = vld [vmem:[%s1 + $0x8] sm:$0xff]
    %v31 = vld [vmem:[%s1 + $0x10] sm:$0xff]
    %v32 = vld [vmem:[%s1 + $0x18] sm:$0xff]
    %v33 = vld [vmem:[%s1 + $0x20] sm:$0xff]
    %v34 = vld [vmem:[%s0] sm:$0xff]
    %v35 = vld [vmem:[%s2] sm:$0xff]
    %v36 = vld [vmem:[%s2 + $0x8] sm:$0xff]
    %v37 = vld [vmem:[%s2 + $0x10] sm:$0xff]
    %v38 = vld [vmem:[%s2 + $0x18] sm:$0xff]
    %v39 = vld [vmem:[%s2 + $0x20] sm:$0xff]
    %41 = vset.pattern.permute.xlu0 0
    %42 = vperm.xlu0 %41, %v35
    %v43 = vpop.permute.xlu0 %42
    %46 = vset.pattern.permute.xlu0 0
    %47 = vperm.xlu0 %46, %v36
    %v48 = vpop.permute.xlu0 %47
    %51 = vset.pattern.permute.xlu0 0
    %52 = vperm.xlu0 %51, %v37
    %v53 = vpop.permute.xlu0 %52
    %56 = vset.pattern.permute.xlu0 0
    %57 = vperm.xlu0 %56, %v38
    %v58 = vpop.permute.xlu0 %57
    %61 = vset.pattern.permute.xlu0 0
    %62 = vperm.xlu0 %61, %v39
    %v63 = vpop.permute.xlu0 %62
    %vm65 = vcmask 64512
    %v67 = vsel %vm65, %v29, 0
    %v70 = vsel %vm65, %v30, 0
    %v73 = vsel %vm65, %v31, 0
    %v76 = vsel %vm65, %v32, 0
    %v79 = vsel %vm65, %v33, 0
    %81 = vmatprep.subr.mxu0 0.0
    %82 = vmatpush1.msra.mxu0 %v34
    %83 = vmatprep.subr.mxu0 0.0
    %84 = vmatpush1.msra.mxu0 0.0
    %85 = vmatprep.subr.mxu0 0.0
    %86 = vmatpush1.msra.mxu0 0.0
    %87 = vmatprep.subr.mxu0 0.0
    %88 = vmatpush1.msra.mxu0 0.0
    %89 = vmatprep.subr.mxu0 0.0
    %90 = vmatpush1.msra.mxu0 0.0
    %91 = vmatprep.subr.mxu0 0.0
    %92 = vmatpush1.msra.mxu0 0.0
    %93 = vmatprep.subr.mxu0 0.0
    %94 = vmatpush1.msra.mxu0 0.0
    %95 = vmatprep.subr.mxu0 0.0
    %96 = vmatpush1.msra.mxu0 0.0
    %97 = vmatprep.subr.mxu0 0.0
    %98 = vmatpush1.msra.mxu0 0.0
    %99 = vmatprep.subr.mxu0 0.0
    %100 = vmatpush1.msra.mxu0 0.0
    %101 = vmatprep.subr.mxu0 0.0
    %102 = vmatpush1.msra.mxu0 0.0
    %103 = vmatprep.subr.mxu0 0.0
    %104 = vmatpush1.msra.mxu0 0.0
    %105 = vmatprep.subr.mxu0 0.0
    %106 = vmatpush1.msra.mxu0 0.0
    %107 = vmatprep.subr.mxu0 0.0
    %108 = vmatpush1.msra.mxu0 0.0
    %109 = vmatprep.subr.mxu0 0.0
    %110 = vmatpush1.msra.mxu0 0.0
    %111 = vmatprep.subr.mxu0 0.0
    %112 = vmatpush1.msra.mxu0 0.0
    %113 = vmatprep.subr.mxu0 0.0
    %114 = vmatpush1.msra.mxu0 0.0
    %115 = vmatprep.subr.mxu0 0.0
    %116 = vmatpush1.msra.mxu0 0.0
    %117 = vmatprep.subr.mxu0 0.0
    %118 = vmatpush1.msra.mxu0 0.0
    %119 = vmatprep.subr.mxu0 0.0
    %120 = vmatpush1.msra.mxu0 0.0
    %121 = vmatprep.subr.mxu0 0.0
    %122 = vmatpush1.msra.mxu0 0.0
    %123 = vmatprep.subr.mxu0 0.0
    %124 = vmatpush1.msra.mxu0 0.0
    %125 = vmatprep.subr.mxu0 0.0
    %126 = vmatpush1.msra.mxu0 0.0
    %127 = vmatprep.subr.mxu0 0.0
    %128 = vmatpush1.msra.mxu0 0.0
    %129 = vmatprep.subr.mxu0 0.0
    %130 = vmatpush1.msra.mxu0 0.0
    %131 = vmatprep.subr.mxu0 0.0
    %132 = vmatpush1.msra.mxu0 0.0
    %133 = vmatprep.subr.mxu0 0.0
    %134 = vmatpush1.msra.mxu0 0.0
    %135 = vmatprep.subr.mxu0 0.0
    %136 = vmatpush1.msra.mxu0 0.0
    %137 = vmatprep.subr.mxu0 0.0
    %138 = vmatpush1.msra.mxu0 0.0
    %139 = vmatprep.subr.mxu0 0.0
    %140 = vmatpush1.msra.mxu0 0.0
    %141 = vmatprep.subr.mxu0 0.0
    %142 = vmatpush1.msra.mxu0 0.0
    %143 = vmatprep.subr.mxu0 0.0
    %144 = vmatpush1.msra.mxu0 0.0
    %145 = vmatprep.mubr.f32.mxu0 0.0
    %146 = vmatmul.mubr.f32.gmra.mrb[0].mxu0 %v67
    %v147 = vpop.f32.mrb[0].mxu0
    %v148 = vadd.f32 %v43, %v147
    %v149 = vpop.f32.mrb[0].mxu0
    %150 = vmatprep.mubr.f32.mxu0 0.0
    %151 = vmatmul.mubr.f32.gmra.mrb[0].mxu0 %v70
    %v152 = vpop.f32.mrb[0].mxu0
    %v153 = vadd.f32 %v48, %v152
    %v154 = vpop.f32.mrb[0].mxu0
    %155 = vmatprep.mubr.f32.mxu0 0.0
    %156 = vmatmul.mubr.f32.gmra.mrb[0].mxu0 %v73
    %v157 = vpop.f32.mrb[0].mxu0
    %v158 = vadd.f32 %v53, %v157
    %v159 = vpop.f32.mrb[0].mxu0
    %160 = vmatprep.mubr.f32.mxu0 0.0
    %161 = vmatmul.mubr.f32.gmra.mrb[0].mxu0 %v76
    %v162 = vpop.f32.mrb[0].mxu0
    %v163 = vadd.f32 %v58, %v162
    %v164 = vpop.f32.mrb[0].mxu0
    %165 = vmatprep.mubr.f32.mxu0 0.0
    %166 = vmatmul.mubr.f32.gmra.mrb[0].mxu0 %v79
    %v167 = vpop.f32.mrb[0].mxu0
    %v168 = vadd.f32 %v63, %v167
    %v169 = vpop.f32.mrb[0].mxu0
    %170 = vdwg.mxu0
    %v171 = vmax.f32 %v148, 0.0
    %v172 = vmax.f32 %v153, 0.0
    %v173 = vmax.f32 %v158, 0.0
    %v174 = vmax.f32 %v163, 0.0
    %v175 = vmax.f32 %v168, 0.0
    %v176 = vld [vmem:[%s3] sm:$0xff]
    %v177 = vld [vmem:[%s3 + $0x8] sm:$0xff]
    %v178 = vld [vmem:[%s3 + $0x10] sm:$0xf]
    %v179 = vld [vmem:[%s4] sm:$0xff]
    %v180 = vld [vmem:[%s4 + $0x8] sm:$0xff]
    %v181 = vld [vmem:[%s4 + $0x10] sm:$0xf]
    %183 = vset.pattern.permute.xlu0 0
    %184 = vperm.xlu0 %183, %v179
    %v185 = vpop.permute.xlu0 %184
    %188 = vset.pattern.permute.xlu0 0
    %189 = vperm.xlu0 %188, %v180
    %v190 = vpop.permute.xlu0 %189
    %193 = vset.pattern.permute.xlu0 0
    %194 = vperm.xlu0 %193, %v181
    %v195 = vpop.permute.xlu0 %194
    %vm197 = vcmask 326656
    %v199 = vsel %vm197, %v176, 0
    %v202 = vsel %vm197, %v177, 0
    %v205 = vsel %vm197, %v178, 0
    %207 = vmatprep.subr.mxu0 0.0
    %208 = vmatpush1.msra.mxu0 %v171
    %209 = vmatprep.subr.mxu0 0.0
    %210 = vmatpush1.msra.mxu0 %v172
    %211 = vmatprep.subr.mxu0 0.0
    %212 = vmatpush1.msra.mxu0 %v173
    %213 = vmatprep.subr.mxu0 0.0
    %214 = vmatpush1.msra.mxu0 %v174
    %215 = vmatprep.subr.mxu0 0.0
    %216 = vmatpush1.msra.mxu0 %v175
    %217 = vmatprep.subr.mxu0 0.0
    %218 = vmatpush1.msra.mxu0 0.0
    %219 = vmatprep.subr.mxu0 0.0
    %220 = vmatpush1.msra.mxu0 0.0
    %221 = vmatprep.subr.mxu0 0.0
    %222 = vmatpush1.msra.mxu0 0.0
    %223 = vmatprep.subr.mxu0 0.0
    %224 = vmatpush1.msra.mxu0 0.0
    %225 = vmatprep.subr.mxu0 0.0
    %226 = vmatpush1.msra.mxu0 0.0
    %227 = vmatprep.subr.mxu0 0.0
    %228 = vmatpush1.msra.mxu0 0.0
    %229 = vmatprep.subr.mxu0 0.0
    %230 = vmatpush1.msra.mxu0 0.0
    %231 = vmatprep.subr.mxu0 0.0
    %232 = vmatpush1.msra.mxu0 0.0
    %233 = vmatprep.subr.mxu0 0.0
    %234 = vmatpush1.msra.mxu0 0.0
    %235 = vmatprep.subr.mxu0 0.0
    %236 = vmatpush1.msra.mxu0 0.0
    %237 = vmatprep.subr.mxu0 0.0
    %238 = vmatpush1.msra.mxu0 0.0
    %239 = vmatprep.subr.mxu0 0.0
    %240 = vmatpush1.msra.mxu0 0.0
    %241 = vmatprep.subr.mxu0 0.0
    %242 = vmatpush1.msra.mxu0 0.0
    %243 = vmatprep.subr.mxu0 0.0
    %244 = vmatpush1.msra.mxu0 0.0
    %245 = vmatprep.subr.mxu0 0.0
    %246 = vmatpush1.msra.mxu0 0.0
    %247 = vmatprep.subr.mxu0 0.0
    %248 = vmatpush1.msra.mxu0 0.0
    %249 = vmatprep.subr.mxu0 0.0
    %250 = vmatpush1.msra.mxu0 0.0
    %251 = vmatprep.subr.mxu0 0.0
    %252 = vmatpush1.msra.mxu0 0.0
    %253 = vmatprep.subr.mxu0 0.0
    %254 = vmatpush1.msra.mxu0 0.0
    %255 = vmatprep.subr.mxu0 0.0
    %256 = vmatpush1.msra.mxu0 0.0
    %257 = vmatprep.subr.mxu0 0.0
    %258 = vmatpush1.msra.mxu0 0.0
    %259 = vmatprep.subr.mxu0 0.0
    %260 = vmatpush1.msra.mxu0 0.0
    %261 = vmatprep.subr.mxu0 0.0
    %262 = vmatpush1.msra.mxu0 0.0
    %263 = vmatprep.subr.mxu0 0.0
    %264 = vmatpush1.msra.mxu0 0.0
    %265 = vmatprep.subr.mxu0 0.0
    %266 = vmatpush1.msra.mxu0 0.0
    %267 = vmatprep.subr.mxu0 0.0
    %268 = vmatpush1.msra.mxu0 0.0
    %269 = vmatprep.subr.mxu0 0.0
    %270 = vmatpush1.msra.mxu0 0.0
    %271 = vmatprep.mubr.f32.mxu0 0.0
    %272 = vmatmul.mubr.f32.gmra.mrb[0].mxu0 %v199
    %v273 = vpop.f32.mrb[0].mxu0
    %v274 = vadd.f32 %v185, %v273
    %v275 = vpop.f32.mrb[0].mxu0
    %276 = vmatprep.mubr.f32.mxu0 0.0
    %277 = vmatmul.mubr.f32.gmra.mrb[0].mxu0 %v202
    %v278 = vpop.f32.mrb[0].mxu0
    %v279 = vadd.f32 %v190, %v278
    %v280 = vpop.f32.mrb[0].mxu0
    %281 = vmatprep.mubr.f32.mxu0 0.0
    %282 = vmatmul.mubr.f32.gmra.mrb[0].mxu0 %v205
    %v283 = vpop.f32.mrb[0].mxu0
    %v284 = vadd.f32 %v195, %v283
    %v285 = vpop.f32.mrb[0].mxu0
    %286 = vdwg.mxu0
    %v287 = vmul.f32 %v274, 0.5
    %v288 = vmul.f32 %v279, 0.5
    %v289 = vmul.f32 %v284, 0.5
    %v290 = vtanh.pop %v287
    %v291 = vtanh.pop %v288
    %v292 = vtanh.pop %v289
    %v293 = vmul.f32 %v290, 0.5
    %v294 = vmul.f32 %v291, 0.5
    %v295 = vmul.f32 %v292, 0.5
    %v296 = vadd.f32 %v293, 0.5
    %v297 = vadd.f32 %v294, 0.5
    %v298 = vadd.f32 %v295, 0.5
    %v299 = vld [vmem:[%s5] sm:$0xff]
    %v300 = vld [vmem:[%s5 + $0x8] sm:$0xff]
    %v301 = vld [vmem:[%s5 + $0x10] sm:$0xf]
    %303 = vset.pattern.permute.xlu0 0
    %304 = vperm.xlu0 %303, %v299
    %v305 = vpop.permute.xlu0 %304
    %308 = vset.pattern.permute.xlu0 0
    %309 = vperm.xlu0 %308, %v300
    %v310 = vpop.permute.xlu0 %309
    %313 = vset.pattern.permute.xlu0 0
    %314 = vperm.xlu0 %313, %v301
    %v315 = vpop.permute.xlu0 %314
    %v317 = vmul.f32 %v305, %v296
    %v318 = vmul.f32 %v310, %v297
    %v319 = vmul.f32 %v315, %v298
    %v320 = vadd.f32 %v317, %v318
    %vm321 = vcmask 1043456
    %v322 = vsel %vm321, %v319, 0.0
    %v323 = vadd.f32 %v320, %v322
    %v324 = vrot.slane %v323, 4
    %v325 = vadd.f32 %v323, %v324
    %v326 = vrot.slane %v325, 2
    %v327 = vadd.f32 %v325, %v326
    %v328 = vrot.slane %v327, 1
    %v329 = vadd.f32 %v327, %v328
    %v330 = vld [vmem:[#allocation2] sm:$0x1]
    %332 = vset.pattern.permute.xlu0 0
    %333 = vperm.xlu0 %332, %v330
    %v334 = vpop.permute.xlu0 %333
    %v336 = vlaneseq
    %v337 = vshrl.u32 %v336, 7
    %v338 = vsub.s32 0, %v337
    %v339 = vrot.slane %v334, %v338
    %v340 = vadd.f32 %v329, %v339
    %341 = vst [vmem:[#allocation3] sm:$0x1] %v340
    // Predicated region
    $region30: #{critic_forward.1} parent=1 // pred_check
      _
    $region31: #{critic_forward.1} parent=1 // pred_check_branch
      %343 = sbr.rel (0) target = $region33
    $region32: #{critic_forward.1} parent=1 // pred_region
      %s345 = ssub.s32 16, 16
      %346 = vsyncadd [#allocation4], %s345
      %s348 = sshll.u32 [#allocation3], 4
      %s349 = int_to_ptr.vmem [resolvable:$true] %s348
      %351 = dma.vmem_to_hbm [thread:$0]  %s349, 16, %s7, [#allocation4]
    $region33: #{critic_forward.1} parent=1 // pred_fallthru
      _
    // Predicated region
    $region34: #{critic_forward.1} parent=1 // pred_check
      _
    $region35: #{critic_forward.1} parent=1 // pred_check_branch
      %353 = sbr.rel (0) target = $region37
    $region36: #{critic_forward.1} parent=1 // pred_region
      %354 = dma.done [#allocation4], 16
    $region37: #{critic_forward.1} parent=1 // pred_fallthru
      _
    %355 = vsyncpa [#allocation4], 1

</llo_original>
